<compile_context>
chip_gen: v7x
topology: tpu7x:2x2x1
jax: 0.10.0
libtpu: 0.0.40
codegen_flags: <defaults>
</compile_context>

<pallas_src>
import functools

import jax
import jax.numpy as jnp
from jax.experimental import pallas as pl
from jax.experimental.pallas import tpu as pltpu

# Logical / padded layer widths.
HID_A = 200        # fc1 (actor trunk)
HID_C = 100        # c1  (critic trunk)
HID_A_PAD = 256    # fc1 padded to lane multiple
HID_C_PAD = 128    # c1 padded to lane multiple
HID_PAD = HID_A_PAD + HID_C_PAD   # 384 = fused hidden width
HEAD_PAD = 128     # packed-output slab width (mu | sigma | value | zero pad)


def _round_up(n, m):
    return ((n + m - 1) // m) * m


def net_kernel(x_ref, w_in_ref, b_in_ref, w_head_ref, b_head_ref, out_ref,
               *, action_dim):
    x = x_ref[...]                                             # (TB, state_dim)

    # Fused input layer: [fc1_pad | c1_pad], one MXU pass.
    h = jnp.dot(x, w_in_ref[...], preferred_element_type=jnp.float32)
    h = jnp.clip(h + b_in_ref[...], 0.0, 6.0)                  # relu6; padded lanes stay 0

    # Fused head layer (block-diagonal): mu | sigma | value in one MXU pass.
    y = jnp.dot(h, w_head_ref[...], preferred_element_type=jnp.float32)
    y = y + b_head_ref[...]                                    # (TB, HEAD_PAD)

    # Per-column epilogue selected by lane index (all VPU/EUP work, lane dense).
    col = jax.lax.broadcasted_iota(jnp.int32, y.shape, 1)
    mu = 2.0 * jnp.tanh(y)
    # numerically-stable softplus: max(y,0) + log1p(exp(-|y|))
    sigma = jnp.maximum(y, 0.0) + jnp.log1p(jnp.exp(-jnp.abs(y))) + 0.001
    out = jnp.where(col < action_dim, mu,
                    jnp.where(col < 2 * action_dim, sigma, y))
    out_ref[...] = out


def pack_params(p, state_dim, action_dim):
    """Pack the 5 Linear layers into one fused input weight and one fused head weight.

    Padded rows/columns are exactly zero, so they cannot leak into the outputs.
    """
    f32 = jnp.float32
    a = action_dim

    w_in = jnp.zeros((state_dim, HID_PAD), f32)
    w_in = w_in.at[:, :HID_A].set(p["w_fc1"])
    w_in = w_in.at[:, HID_A_PAD:HID_A_PAD + HID_C].set(p["w_c1"])

    b_in = jnp.zeros((1, HID_PAD), f32)
    b_in = b_in.at[:, :HID_A].set(p["b_fc1"])
    b_in = b_in.at[:, HID_A_PAD:HID_A_PAD + HID_C].set(p["b_c1"])

    w_head = jnp.zeros((HID_PAD, HEAD_PAD), f32)
    w_head = w_head.at[:HID_A, :a].set(p["w_mu"])
    w_head = w_head.at[:HID_A, a:2 * a].set(p["w_sig"])
    w_head = w_head.at[HID_A_PAD:HID_A_PAD + HID_C, 2 * a:2 * a + 1].set(p["w_v"])

    b_head = jnp.zeros((1, HEAD_PAD), f32)
    b_head = b_head.at[:, :a].set(p["b_mu"])
    b_head = b_head.at[:, a:2 * a].set(p["b_sig"])
    b_head = b_head.at[:, 2 * a:2 * a + 1].set(p["b_v"])

    return {"w_in": w_in, "b_in": b_in, "w_head": w_head, "b_head": b_head}


def net_forward(x, packed, action_dim):
    """Forward pass. x: (B, state_dim) f32. Returns (mu, sigma, values)."""
    B, state_dim = x.shape

    # Choose a batch tile and pad the batch so the grid divides evenly.
    if B >= 128:
        tb = 128
    else:
        tb = _round_up(max(B, 1), 8)
    b_pad = _round_up(B, tb)
    if b_pad != B:
        x = jnp.pad(x, ((0, b_pad - B), (0, 0)))

    grid = (b_pad // tb,)
    kernel = functools.partial(net_kernel, action_dim=action_dim)

    out = pl.pallas_call(
        kernel,
        out_shape=jax.ShapeDtypeStruct((b_pad, HEAD_PAD), jnp.float32),
        grid=grid,
        in_specs=[
            pl.BlockSpec((tb, state_dim), lambda i: (i, 0)),          # x: pipelined
            pl.BlockSpec((state_dim, HID_PAD), lambda i: (0, 0)),     # weights: resident
            pl.BlockSpec((1, HID_PAD), lambda i: (0, 0)),
            pl.BlockSpec((HID_PAD, HEAD_PAD), lambda i: (0, 0)),
            pl.BlockSpec((1, HEAD_PAD), lambda i: (0, 0)),
        ],
        out_specs=pl.BlockSpec((tb, HEAD_PAD), lambda i: (i, 0)),     # lane-dense slab
        compiler_params=pltpu.CompilerParams(
            dimension_semantics=("parallel",)),
    )(x, packed["w_in"], packed["b_in"], packed["w_head"], packed["b_head"])

    a = action_dim
    mu = out[:B, :a]
    sigma = out[:B, a:2 * a]
    values = out[:B, 2 * a:2 * a + 1]
    return mu, sigma, values


def init_params(key, state_dim, action_dim):
    """Mirrors set_init: weights ~ N(0, 0.1), biases = 0. Stored as (in, out)."""
    ks = jax.random.split(key, 5)
    std = 0.1

    def w(k, shape):
        return std * jax.random.normal(k, shape, dtype=jnp.float32)

    return {
        "w_fc1": w(ks[0], (state_dim, HID_A)),
        "b_fc1": jnp.zeros((1, HID_A), jnp.float32),
        "w_mu": w(ks[1], (HID_A, action_dim)),
        "b_mu": jnp.zeros((1, action_dim), jnp.float32),
        "w_sig": w(ks[2], (HID_A, action_dim)),
        "b_sig": jnp.zeros((1, action_dim), jnp.float32),
        "w_c1": w(ks[3], (state_dim, HID_C)),
        "b_c1": jnp.zeros((1, HID_C), jnp.float32),
        "w_v": w(ks[4], (HID_C, 1)),
        "b_v": jnp.zeros((1, 1), jnp.float32),
    }


def reference_forward(x, p):
    """Pure-JAX reference (matches the PyTorch Net.forward)."""
    fc1 = jnp.clip(x @ p["w_fc1"] + p["b_fc1"], 0.0, 6.0)
    mu = 2.0 * jnp.tanh(fc1 @ p["w_mu"] + p["b_mu"])
    sigma = jax.nn.softplus(fc1 @ p["w_sig"] + p["b_sig"]) + 0.001
    c1 = jnp.clip(x @ p["w_c1"] + p["b_c1"], 0.0, 6.0)
    values = c1 @ p["w_v"] + p["b_v"]
    return mu, sigma, values


# TODO(synk): choose_action (Normal sampling) and loss_func are training/host-side
# logic and are not part of the forward kernel.

if __name__ == "__main__":
    key = jax.random.PRNGKey(0)
    k_x, k_p = jax.random.split(key)

    batch = 8
    state_dim = 3      # e.g. Pendulum-v0 observation dim
    action_dim = 1

    x = jax.random.normal(k_x, (batch, state_dim), dtype=jnp.float32)
    params = init_params(k_p, state_dim, action_dim)
    packed = pack_params(params, state_dim, action_dim)

    mu, sigma, values = net_forward(x, packed, action_dim)
    jax.block_until_ready((mu, sigma, values))

    mu_r, sigma_r, values_r = reference_forward(x, params)
    assert mu.shape == (batch, action_dim)
    assert sigma.shape == (batch, action_dim)
    assert values.shape == (batch, 1)
    assert jnp.allclose(mu, mu_r, atol=1e-5)
    assert jnp.allclose(sigma, sigma_r, atol=1e-5)
    assert jnp.allclose(values, values_r, atol=1e-5)

    print("KERNEL_OK")
</pallas_src>

<mosaic_0001>
module attributes {stable_mosaic.version = 11 : i64} {
  func.func @net_kernel(%arg0: i32, %arg1: memref<8x3xf32, #tpu.memory_space<vmem>>, %arg2: memref<3x384xf32, #tpu.memory_space<vmem>>, %arg3: memref<1x384xf32, #tpu.memory_space<vmem>>, %arg4: memref<384x128xf32, #tpu.memory_space<vmem>>, %arg5: memref<1x128xf32, #tpu.memory_space<vmem>>, %arg6: memref<8x128xf32, #tpu.memory_space<vmem>>) attributes {dimension_semantics = [#tpu.dimension_semantics<parallel>], iteration_bounds = array<i64: 1>, scalar_prefetch = 0 : i64, scratch_operands = 0 : i64, tpu.core_type = #tpu.core_type<tc>, window_params = [{transform_indices = @transform_0, window_bounds = array<i64: 8, 3>}, {pipeline_mode = #tpu.pipeline_mode<synchronous>, transform_indices = @transform_1, window_bounds = array<i64: 3, 384>}, {pipeline_mode = #tpu.pipeline_mode<synchronous>, transform_indices = @transform_2, window_bounds = array<i64: 1, 384>}, {pipeline_mode = #tpu.pipeline_mode<synchronous>, transform_indices = @transform_3, window_bounds = array<i64: 384, 128>}, {pipeline_mode = #tpu.pipeline_mode<synchronous>, transform_indices = @transform_4, window_bounds = array<i64: 1, 128>}, {transform_indices = @transform_5, window_bounds = array<i64: 8, 128>}]} {
    %c0 = arith.constant 0 : index
    %c0_0 = arith.constant 0 : index
    %0 = vector.load %arg1[%c0, %c0_0] : memref<8x3xf32, #tpu.memory_space<vmem>>, vector<8x3xf32>
    %c0_1 = arith.constant 0 : index
    %c0_2 = arith.constant 0 : index
    %1 = vector.load %arg2[%c0_1, %c0_2] : memref<3x384xf32, #tpu.memory_space<vmem>>, vector<3x384xf32>
    %cst = arith.constant dense<0.000000e+00> : vector<8x384xf32>
    %2 = tpu.matmul %0, %1, %cst {dimension_numbers = #tpu.dot_dimension_numbers<[1], [0], [0], [1], [0, 0, 1, 1], [], []>} : vector<8x3xf32>, vector<3x384xf32>, vector<8x384xf32> -> vector<8x384xf32>
    %c0_3 = arith.constant 0 : index
    %c0_4 = arith.constant 0 : index
    %3 = vector.load %arg3[%c0_3, %c0_4] : memref<1x384xf32, #tpu.memory_space<vmem>>, vector<1x384xf32>
    %4 = vector.broadcast %3 : vector<1x384xf32> to vector<8x384xf32>
    %5 = arith.addf %2, %4 : vector<8x384xf32>
    %cst_5 = arith.constant 0.000000e+00 : f32
    %cst_6 = arith.constant 6.000000e+00 : f32
    %6 = vector.broadcast %cst_5 : f32 to vector<8x384xf32>
    %7 = arith.maximumf %6, %5 : vector<8x384xf32>
    %8 = vector.broadcast %cst_6 : f32 to vector<8x384xf32>
    %9 = arith.minimumf %8, %7 : vector<8x384xf32>
    %c0_7 = arith.constant 0 : index
    %c0_8 = arith.constant 0 : index
    %10 = vector.load %arg4[%c0_7, %c0_8] : memref<384x128xf32, #tpu.memory_space<vmem>>, vector<384x128xf32>
    %cst_9 = arith.constant dense<0.000000e+00> : vector<8x128xf32>
    %11 = tpu.matmul %9, %10, %cst_9 {dimension_numbers = #tpu.dot_dimension_numbers<[1], [0], [0], [1], [0, 0, 1, 1], [], []>} : vector<8x384xf32>, vector<384x128xf32>, vector<8x128xf32> -> vector<8x128xf32>
    %c0_10 = arith.constant 0 : index
    %c0_11 = arith.constant 0 : index
    %12 = vector.load %arg5[%c0_10, %c0_11] : memref<1x128xf32, #tpu.memory_space<vmem>>, vector<1x128xf32>
    %13 = vector.broadcast %12 : vector<1x128xf32> to vector<8x128xf32>
    %14 = arith.addf %11, %13 : vector<8x128xf32>
    %15 = tpu.iota {dimensions = array<i32: 1>} : vector<8x128xi32>
    %16 = math.tanh %14 : vector<8x128xf32>
    %cst_12 = arith.constant 2.000000e+00 : f32
    %17 = vector.broadcast %cst_12 : f32 to vector<8x128xf32>
    %18 = arith.mulf %17, %16 : vector<8x128xf32>
    %cst_13 = arith.constant 0.000000e+00 : f32
    %19 = vector.broadcast %cst_13 : f32 to vector<8x128xf32>
    %20 = arith.maximumf %14, %19 : vector<8x128xf32>
    %21 = math.absf %14 : vector<8x128xf32>
    %cst_14 = arith.constant 0.000000e+00 : f32
    %22 = vector.broadcast %cst_14 : f32 to vector<8x128xf32>
    %23 = arith.subf %22, %21 : vector<8x128xf32>
    %24 = math.exp %23 : vector<8x128xf32>
    %25 = math.log1p %24 : vector<8x128xf32>
    %26 = arith.addf %20, %25 : vector<8x128xf32>
    %cst_15 = arith.constant 1.000000e-03 : f32
    %27 = vector.broadcast %cst_15 : f32 to vector<8x128xf32>
    %28 = arith.addf %26, %27 : vector<8x128xf32>
    %c1_i32 = arith.constant 1 : i32
    %29 = vector.broadcast %c1_i32 : i32 to vector<8x128xi32>
    %30 = arith.cmpi slt, %15, %29 : vector<8x128xi32>
    %c2_i32 = arith.constant 2 : i32
    %31 = vector.broadcast %c2_i32 : i32 to vector<8x128xi32>
    %32 = arith.cmpi slt, %15, %31 : vector<8x128xi32>
    %33 = arith.select %32, %28, %14 : vector<8x128xi1>, vector<8x128xf32>
    %34 = arith.select %30, %18, %33 : vector<8x128xi1>, vector<8x128xf32>
    %c0_16 = arith.constant 0 : index
    %c0_17 = arith.constant 0 : index
    %35 = vector.load %arg6[%c0_16, %c0_17] : memref<8x128xf32, #tpu.memory_space<vmem>>, vector<8x128xf32>
    tpu.vector_store %arg6[%c0_16, %c0_17], %34 {strides = array<i32>} : memref<8x128xf32, #tpu.memory_space<vmem>>, vector<8x128xf32>,
    return
  }
  func.func @transform_0(%arg0: i32) -> (i32, i32) {
    %c0_i32 = arith.constant 0 : i32
    %c0_i32_0 = arith.constant 0 : i32
    return %arg0, %c0_i32 : i32, i32
  }
  func.func @transform_1(%arg0: i32) -> (i32, i32) {
    %c0_i32 = arith.constant 0 : i32
    %c0_i32_0 = arith.constant 0 : i32
    %c0_i32_1 = arith.constant 0 : i32
    return %c0_i32, %c0_i32_0 : i32, i32
  }
  func.func @transform_2(%arg0: i32) -> (i32, i32) {
    %c0_i32 = arith.constant 0 : i32
    %c0_i32_0 = arith.constant 0 : i32
    %c0_i32_1 = arith.constant 0 : i32
    return %c0_i32, %c0_i32_0 : i32, i32
  }
  func.func @transform_3(%arg0: i32) -> (i32, i32) {
    %c0_i32 = arith.constant 0 : i32
    %c0_i32_0 = arith.constant 0 : i32
    %c0_i32_1 = arith.constant 0 : i32
    return %c0_i32, %c0_i32_0 : i32, i32
  }
  func.func @transform_4(%arg0: i32) -> (i32, i32) {
    %c0_i32 = arith.constant 0 : i32
    %c0_i32_0 = arith.constant 0 : i32
    %c0_i32_1 = arith.constant 0 : i32
    return %c0_i32, %c0_i32_0 : i32, i32
  }
  func.func @transform_5(%arg0: i32) -> (i32, i32) {
    %c0_i32 = arith.constant 0 : i32
    %c0_i32_0 = arith.constant 0 : i32
    return %arg0, %c0_i32 : i32, i32
  }
}

</mosaic_0001>

<llo_original>
// kernel: tpu_custom_call.1
$region0: #{tpu_custom_call.1}
  #allocation0 [shape = 'u32[]', space=smem, size = 0x4, offset = 0x4, fixed_abs, tag = 'smem constant byte address 0x4 - core index']
  #allocation1 [shape = 'u32[144,128]{1,0:T(1,128)}', space=vmem, size = 0x12000, scoped, tag = 'internal scratch']
  %s0 = inlined_call_operand.vmem [shape: f32[8,3], index: 0, kind: input, shape index: {}]
  %s1 = inlined_call_operand.vmem [shape: f32[3,384], index: 1, kind: input, shape index: {}]
  %s2 = inlined_call_operand.vmem [shape: f32[1,384], index: 2, kind: input, shape index: {}]
  %s3 = inlined_call_operand.hbm [shape: f32[384,128], index: 3, kind: input, shape index: {}]
  %s4 = inlined_call_operand.vmem [shape: f32[1,128], index: 4, kind: input, shape index: {}]
  %s5 = inlined_call_operand.hbm [shape: f32[8,128], index: 5, kind: output, shape index: {}]
  %s6 = sld [smem:[#allocation0]]
  $region34: #{tpu_custom_call.1} parent=0
    _
  %s8 = ssub.s32 1, %s6
  %s9 = scalar_select 0, %s8, %s6
  $region1: #{tpu_custom_call.1} parent=0
    #allocation2 [shape = 'u8[196608]{0}', space=vmem, size = 0x30000, scoped, tag = 'input window, operand 3, single buffered']
    #allocation3 [shape = 's32[1]{0}', space=sflag, size = 0x4, scoped, tag = 'scoped memory for tpu_custom_call.1']
    #allocation4 [shape = 's32[1]{0}', space=sflag, size = 0x4, scoped, tag = 'scoped memory for tpu_custom_call.1']
    #allocation5 [shape = 'u8[4096]{0}', space=vmem, size = 0x1000, scoped, tag = 'output window, operand 0, single buffered']
    %10 = vsyncpa [#allocation3], 0
    %11 = vsyncpa [#allocation4], 0
    // Predicated region
    $region2: #{tpu_custom_call.1} parent=1 // pred_check
      _
    $region3: #{tpu_custom_call.1} parent=1 // pred_check_branch
      %13 = sbr.rel (0) target = $region5
    $region4: #{tpu_custom_call.1} parent=1 // pred_region
      _
    $region5: #{tpu_custom_call.1} parent=1 // pred_fallthru
      _
    // Predicated region
    $region6: #{tpu_custom_call.1} parent=1 // pred_check
      _
    $region7: #{tpu_custom_call.1} parent=1 // pred_check_branch
      %15 = sbr.rel (0) target = $region9
    $region8: #{tpu_custom_call.1} parent=1 // pred_region
      _
    $region9: #{tpu_custom_call.1} parent=1 // pred_fallthru
      _
    // Predicated region
    $region10: #{tpu_custom_call.1} parent=1 // pred_check
      _
    $region11: #{tpu_custom_call.1} parent=1 // pred_check_branch
      %17 = sbr.rel (0) target = $region13
    $region12: #{tpu_custom_call.1} parent=1 // pred_region
      _
    $region13: #{tpu_custom_call.1} parent=1 // pred_fallthru
      _
    // Predicated region
    $region14: #{tpu_custom_call.1} parent=1 // pred_check
      _
    $region15: #{tpu_custom_call.1} parent=1 // pred_check_branch
      %19 = sbr.rel (0) target = $region17
    $region16: #{tpu_custom_call.1} parent=1 // pred_region
      %s21 = ssub.s32 6144, 6144
      %22 = vsyncadd [#allocation3], %s21
      %s23 = sshll.u32 [#allocation2], 4
      %s24 = int_to_ptr.vmem [resolvable:$true] %s23
      %29 = dma.hbm_to_vmem [thread:$0]  %s3, 6144, %s24, [#allocation3], 128, 128, 8
    $region17: #{tpu_custom_call.1} parent=1 // pred_fallthru
      _
    // Predicated region
    $region18: #{tpu_custom_call.1} parent=1 // pred_check
      _
    $region19: #{tpu_custom_call.1} parent=1 // pred_check_branch
      %31 = sbr.rel (0) target = $region21
    $region20: #{tpu_custom_call.1} parent=1 // pred_region
      _
    $region21: #{tpu_custom_call.1} parent=1 // pred_fallthru
      _
    // Predicated region
    $region22: #{tpu_custom_call.1} parent=1 // pred_check
      _
    $region23: #{tpu_custom_call.1} parent=1 // pred_check_branch
      %33 = sbr.rel (0) target = $region25
    $region24: #{tpu_custom_call.1} parent=1 // pred_region
      %34 = dma.done [#allocation3], 6144
    $region25: #{tpu_custom_call.1} parent=1 // pred_fallthru
      _
    %v35 = vld [vmem:[%s0] sm:$0xff]
    %v36 = vld [vmem:[%s1] sm:$0x77]
    %v37 = vld [vmem:[%s1 + $0x8] sm:$0x7]
    %v38 = vld [vmem:[%s2] sm:$0x7]
    %v40 = vlaneseq
    %v41 = vshrl.u32 %v40, 7
    %v42 = vsub.s32 0, %v41
    %v43 = vrot.slane %v38, %v42
    %v44 = vlaneseq
    %v45 = vshrl.u32 %v44, 7
    %v46 = vsub.s32 1, %v45
    %v47 = vrot.slane %v38, %v46
    %v48 = vlaneseq
    %v49 = vshrl.u32 %v48, 7
    %v50 = vsub.s32 2, %v49
    %v51 = vrot.slane %v38, %v50
    %v57 = vcombine.high %v36, %v36
    %vm58 = vcmask 23552
    %v60 = vsel %vm58, %v35, 0
    %vm62 = vcmask 1042432
    %v63 = vsel %vm62, %v36, 0
    %v65 = vsel %vm62, %v57, 0
    %v67 = vsel %vm62, %v37, 0
    %69 = vmatprep.subr.mxu0 %v65
    %70 = vmatpush1.msra.mxu0 %v63
    %71 = vmatprep.subr.mxu0 0.0
    %72 = vmatpush1.msra.mxu0 0.0
    %73 = vmatprep.subr.mxu0 0.0
    %74 = vmatpush1.msra.mxu0 0.0
    %75 = vmatprep.subr.mxu0 0.0
    %76 = vmatpush1.msra.mxu0 0.0
    %77 = vmatprep.subr.mxu0 0.0
    %78 = vmatpush1.msra.mxu0 0.0
    %79 = vmatprep.subr.mxu0 0.0
    %80 = vmatpush1.msra.mxu0 0.0
    %81 = vmatprep.subr.mxu0 0.0
    %82 = vmatpush1.msra.mxu0 0.0
    %83 = vmatprep.subr.mxu0 0.0
    %84 = vmatpush1.msra.mxu0 0.0
    %85 = vmatprep.subr.mxu0 0.0
    %86 = vmatpush1.msra.mxu0 0.0
    %87 = vmatprep.subr.mxu0 0.0
    %88 = vmatpush1.msra.mxu0 0.0
    %89 = vmatprep.subr.mxu0 0.0
    %90 = vmatpush1.msra.mxu0 0.0
    %91 = vmatprep.subr.mxu0 0.0
    %92 = vmatpush1.msra.mxu0 0.0
    %93 = vmatprep.subr.mxu0 0.0
    %94 = vmatpush1.msra.mxu0 0.0
    %95 = vmatprep.subr.mxu0 0.0
    %96 = vmatpush1.msra.mxu0 0.0
    %97 = vmatprep.subr.mxu0 0.0
    %98 = vmatpush1.msra.mxu0 0.0
    %99 = vmatprep.subr.mxu0 0.0
    %100 = vmatpush1.msra.mxu0 0.0
    %101 = vmatprep.subr.mxu0 0.0
    %102 = vmatpush1.msra.mxu0 0.0
    %103 = vmatprep.subr.mxu0 0.0
    %104 = vmatpush1.msra.mxu0 0.0
    %105 = vmatprep.subr.mxu0 0.0
    %106 = vmatpush1.msra.mxu0 0.0
    %107 = vmatprep.subr.mxu0 0.0
    %108 = vmatpush1.msra.mxu0 0.0
    %109 = vmatprep.subr.mxu0 0.0
    %110 = vmatpush1.msra.mxu0 0.0
    %111 = vmatprep.subr.mxu0 0.0
    %112 = vmatpush1.msra.mxu0 0.0
    %113 = vmatprep.subr.mxu0 0.0
    %114 = vmatpush1.msra.mxu0 0.0
    %115 = vmatprep.subr.mxu0 0.0
    %116 = vmatpush1.msra.mxu0 0.0
    %117 = vmatprep.subr.mxu0 0.0
    %118 = vmatpush1.msra.mxu0 0.0
    %119 = vmatprep.subr.mxu0 0.0
    %120 = vmatpush1.msra.mxu0 0.0
    %121 = vmatprep.subr.mxu0 0.0
    %122 = vmatpush1.msra.mxu0 0.0
    %123 = vmatprep.subr.mxu0 0.0
    %124 = vmatpush1.msra.mxu0 0.0
    %125 = vmatprep.subr.mxu0 0.0
    %126 = vmatpush1.msra.mxu0 0.0
    %127 = vmatprep.subr.mxu0 0.0
    %128 = vmatpush1.msra.mxu0 0.0
    %129 = vmatprep.subr.mxu0 0.0
    %130 = vmatpush1.msra.mxu0 0.0
    %131 = vmatprep.subr.mxu0 0.0
    %132 = vmatpush1.msra.mxu0 0.0
    %133 = vmatprep.mubr.f32.mxu0 0.0
    %134 = vmatmul.mubr.f32.gmra.mrb[0].mxu0 %v60
    %v135 = vpop.f32.mrb[0].mxu0
    %v136 = vadd.f32 %v43, %v135
    %v137 = vpop.f32.mrb[0].mxu0
    %v138 = vadd.f32 %v47, %v137
    %139 = vdwg.mxu0
    %140 = vmatprep.subr.mxu0 0.0
    %141 = vmatpush1.msra.mxu0 %v67
    %142 = vmatprep.subr.mxu0 0.0
    %143 = vmatpush1.msra.mxu0 0.0
    %144 = vmatprep.subr.mxu0 0.0
    %145 = vmatpush1.msra.mxu0 0.0
    %146 = vmatprep.subr.mxu0 0.0
    %147 = vmatpush1.msra.mxu0 0.0
    %148 = vmatprep.subr.mxu0 0.0
    %149 = vmatpush1.msra.mxu0 0.0
    %150 = vmatprep.subr.mxu0 0.0
    %151 = vmatpush1.msra.mxu0 0.0
    %152 = vmatprep.subr.mxu0 0.0
    %153 = vmatpush1.msra.mxu0 0.0
    %154 = vmatprep.subr.mxu0 0.0
    %155 = vmatpush1.msra.mxu0 0.0
    %156 = vmatprep.subr.mxu0 0.0
    %157 = vmatpush1.msra.mxu0 0.0
    %158 = vmatprep.subr.mxu0 0.0
    %159 = vmatpush1.msra.mxu0 0.0
    %160 = vmatprep.subr.mxu0 0.0
    %161 = vmatpush1.msra.mxu0 0.0
    %162 = vmatprep.subr.mxu0 0.0
    %163 = vmatpush1.msra.mxu0 0.0
    %164 = vmatprep.subr.mxu0 0.0
    %165 = vmatpush1.msra.mxu0 0.0
    %166 = vmatprep.subr.mxu0 0.0
    %167 = vmatpush1.msra.mxu0 0.0
    %168 = vmatprep.subr.mxu0 0.0
    %169 = vmatpush1.msra.mxu0 0.0
    %170 = vmatprep.subr.mxu0 0.0
    %171 = vmatpush1.msra.mxu0 0.0
    %172 = vmatprep.subr.mxu0 0.0
    %173 = vmatpush1.msra.mxu0 0.0
    %174 = vmatprep.subr.mxu0 0.0
    %175 = vmatpush1.msra.mxu0 0.0
    %176 = vmatprep.subr.mxu0 0.0
    %177 = vmatpush1.msra.mxu0 0.0
    %178 = vmatprep.subr.mxu0 0.0
    %179 = vmatpush1.msra.mxu0 0.0
    %180 = vmatprep.subr.mxu0 0.0
    %181 = vmatpush1.msra.mxu0 0.0
    %182 = vmatprep.subr.mxu0 0.0
    %183 = vmatpush1.msra.mxu0 0.0
    %184 = vmatprep.subr.mxu0 0.0
    %185 = vmatpush1.msra.mxu0 0.0
    %186 = vmatprep.subr.mxu0 0.0
    %187 = vmatpush1.msra.mxu0 0.0
    %188 = vmatprep.subr.mxu0 0.0
    %189 = vmatpush1.msra.mxu0 0.0
    %190 = vmatprep.subr.mxu0 0.0
    %191 = vmatpush1.msra.mxu0 0.0
    %192 = vmatprep.subr.mxu0 0.0
    %193 = vmatpush1.msra.mxu0 0.0
    %194 = vmatprep.subr.mxu0 0.0
    %195 = vmatpush1.msra.mxu0 0.0
    %196 = vmatprep.subr.mxu0 0.0
    %197 = vmatpush1.msra.mxu0 0.0
    %198 = vmatprep.subr.mxu0 0.0
    %199 = vmatpush1.msra.mxu0 0.0
    %200 = vmatprep.subr.mxu0 0.0
    %201 = vmatpush1.msra.mxu0 0.0
    %202 = vmatprep.subr.mxu0 0.0
    %203 = vmatpush1.msra.mxu0 0.0
    %204 = vmatprep.mubr.f32.mxu0 0.0
    %205 = vmatmul.mubr.f32.gmra.mrb[0].mxu0 %v60
    %v206 = vpop.f32.mrb[0].mxu0
    %v207 = vadd.f32 %v51, %v206
    %v208 = vpop.f32.mrb[0].mxu0
    %209 = vdwg.mxu0
    %v210 = vmax.f32 %v136, 0.0
    %v211 = vmax.f32 %v138, 0.0
    %v212 = vmax.f32 %v207, 0.0
    %v213 = vmin.f32 %v210, 6.0
    %v214 = vmin.f32 %v211, 6.0
    %v215 = vmin.f32 %v212, 6.0
    %v216 = vld [vmem:[#allocation2] sm:$0xff]
    %v217 = vld [vmem:[#allocation2 + $0x8] sm:$0xff]
    %v218 = vld [vmem:[#allocation2 + $0x10] sm:$0xff]
    %v219 = vld [vmem:[#allocation2 + $0x18] sm:$0xff]
    %v220 = vld [vmem:[#allocation2 + $0x20] sm:$0xff]
    %v221 = vld [vmem:[#allocation2 + $0x28] sm:$0xff]
    %v222 = vld [vmem:[#allocation2 + $0x30] sm:$0xff]
    %v223 = vld [vmem:[#allocation2 + $0x38] sm:$0xff]
    %v224 = vld [vmem:[#allocation2 + $0x40] sm:$0xff]
    %v225 = vld [vmem:[#allocation2 + $0x48] sm:$0xff]
    %v226 = vld [vmem:[#allocation2 + $0x50] sm:$0xff]
    %v227 = vld [vmem:[#allocation2 + $0x58] sm:$0xff]
    %v228 = vld [vmem:[#allocation2 + $0x60] sm:$0xff]
    %v229 = vld [vmem:[#allocation2 + $0x68] sm:$0xff]
    %v230 = vld [vmem:[#allocation2 + $0x70] sm:$0xff]
    %v231 = vld [vmem:[#allocation2 + $0x78] sm:$0xff]
    %v232 = vld [vmem:[#allocation2 + $0x80] sm:$0xff]
    %v233 = vld [vmem:[#allocation2 + $0x88] sm:$0xff]
    %v234 = vld [vmem:[#allocation2 + $0x90] sm:$0xff]
    %v235 = vld [vmem:[#allocation2 + $0x98] sm:$0xff]
    %v236 = vld [vmem:[#allocation2 + $0xa0] sm:$0xff]
    %v237 = vld [vmem:[#allocation2 + $0xa8] sm:$0xff]
    %v238 = vld [vmem:[#allocation2 + $0xb0] sm:$0xff]
    %v239 = vld [vmem:[#allocation2 + $0xb8] sm:$0xff]
    %v240 = vld [vmem:[#allocation2 + $0xc0] sm:$0xff]
    %v241 = vld [vmem:[#allocation2 + $0xc8] sm:$0xff]
    %v242 = vld [vmem:[#allocation2 + $0xd0] sm:$0xff]
    %v243 = vld [vmem:[#allocation2 + $0xd8] sm:$0xff]
    %v244 = vld [vmem:[#allocation2 + $0xe0] sm:$0xff]
    %v245 = vld [vmem:[#allocation2 + $0xe8] sm:$0xff]
    %v246 = vld [vmem:[#allocation2 + $0xf0] sm:$0xff]
    %v247 = vld [vmem:[#allocation2 + $0xf8] sm:$0xff]
    %v248 = vld [vmem:[#allocation2 + $0x100] sm:$0xff]
    %v249 = vld [vmem:[#allocation2 + $0x108] sm:$0xff]
    %v250 = vld [vmem:[#allocation2 + $0x110] sm:$0xff]
    %v251 = vld [vmem:[#allocation2 + $0x118] sm:$0xff]
    %v252 = vld [vmem:[#allocation2 + $0x120] sm:$0xff]
    %v253 = vld [vmem:[#allocation2 + $0x128] sm:$0xff]
    %v254 = vld [vmem:[#allocation2 + $0x130] sm:$0xff]
    %v255 = vld [vmem:[#allocation2 + $0x138] sm:$0xff]
    %v256 = vld [vmem:[#allocation2 + $0x140] sm:$0xff]
    %v257 = vld [vmem:[#allocation2 + $0x148] sm:$0xff]
    %v258 = vld [vmem:[#allocation2 + $0x150] sm:$0xff]
    %v259 = vld [vmem:[#allocation2 + $0x158] sm:$0xff]
    %v260 = vld [vmem:[#allocation2 + $0x160] sm:$0xff]
    %v261 = vld [vmem:[#allocation2 + $0x168] sm:$0xff]
    %v262 = vld [vmem:[#allocation2 + $0x170] sm:$0xff]
    %v263 = vld [vmem:[#allocation2 + $0x178] sm:$0xff]
    %v264 = vld [vmem:[%s4] sm:$0x1]
    %v266 = vlaneseq
    %v267 = vshrl.u32 %v266, 7
    %v268 = vsub.s32 0, %v267
    %v269 = vrot.slane %v264, %v268
    %271 = vmatprep.subr.mxu0 0.0
    %272 = vmatpush1.msra.mxu0 %v216
    %273 = vmatprep.subr.mxu0 0.0
    %274 = vmatpush1.msra.mxu0 %v217
    %275 = vmatprep.subr.mxu0 0.0
    %276 = vmatpush1.msra.mxu0 %v218
    %277 = vmatprep.subr.mxu0 0.0
    %278 = vmatpush1.msra.mxu0 %v219
    %279 = vmatprep.subr.mxu0 0.0
    %280 = vmatpush1.msra.mxu0 %v220
    %281 = vmatprep.subr.mxu0 0.0
    %282 = vmatpush1.msra.mxu0 %v221
    %283 = vmatprep.subr.mxu0 0.0
    %284 = vmatpush1.msra.mxu0 %v222
    %285 = vmatprep.subr.mxu0 0.0
    %286 = vmatpush1.msra.mxu0 %v223
    %287 = vmatprep.subr.mxu0 0.0
    %288 = vmatpush1.msra.mxu0 %v224
    %289 = vmatprep.subr.mxu0 0.0
    %290 = vmatpush1.msra.mxu0 %v225
    %291 = vmatprep.subr.mxu0 0.0
    %292 = vmatpush1.msra.mxu0 %v226
    %293 = vmatprep.subr.mxu0 0.0
    %294 = vmatpush1.msra.mxu0 %v227
    %295 = vmatprep.subr.mxu0 0.0
    %296 = vmatpush1.msra.mxu0 %v228
    %297 = vmatprep.subr.mxu0 0.0
    %298 = vmatpush1.msra.mxu0 %v229
    %299 = vmatprep.subr.mxu0 0.0
    %300 = vmatpush1.msra.mxu0 %v230
    %301 = vmatprep.subr.mxu0 0.0
    %302 = vmatpush1.msra.mxu0 %v231
    %303 = vmatprep.subr.mxu0 0.0
    %304 = vmatpush1.msra.mxu0 %v232
    %305 = vmatprep.subr.mxu0 0.0
    %306 = vmatpush1.msra.mxu0 %v233
    %307 = vmatprep.subr.mxu0 0.0
    %308 = vmatpush1.msra.mxu0 %v234
    %309 = vmatprep.subr.mxu0 0.0
    %310 = vmatpush1.msra.mxu0 %v235
    %311 = vmatprep.subr.mxu0 0.0
    %312 = vmatpush1.msra.mxu0 %v236
    %313 = vmatprep.subr.mxu0 0.0
    %314 = vmatpush1.msra.mxu0 %v237
    %315 = vmatprep.subr.mxu0 0.0
    %316 = vmatpush1.msra.mxu0 %v238
    %317 = vmatprep.subr.mxu0 0.0
    %318 = vmatpush1.msra.mxu0 %v239
    %319 = vmatprep.subr.mxu0 0.0
    %320 = vmatpush1.msra.mxu0 %v240
    %321 = vmatprep.subr.mxu0 0.0
    %322 = vmatpush1.msra.mxu0 %v241
    %323 = vmatprep.subr.mxu0 0.0
    %324 = vmatpush1.msra.mxu0 %v242
    %325 = vmatprep.subr.mxu0 0.0
    %326 = vmatpush1.msra.mxu0 %v243
    %327 = vmatprep.subr.mxu0 0.0
    %328 = vmatpush1.msra.mxu0 %v244
    %329 = vmatprep.subr.mxu0 0.0
    %330 = vmatpush1.msra.mxu0 %v245
    %331 = vmatprep.subr.mxu0 0.0
    %332 = vmatpush1.msra.mxu0 %v246
    %333 = vmatprep.subr.mxu0 0.0
    %334 = vmatpush1.msra.mxu0 %v247
    %335 = vmatprep.mubr.f32.mxu0 %v214
    %336 = vmatmul.mubr.f32.gmra.mrb[0].mxu0 %v213
    %v337 = vpop.f32.mrb[0].mxu0
    %v338 = vadd.f32 %v269, %v337
    %v339 = vpop.f32.mrb[0].mxu0
    %340 = vdwg.mxu0
    %341 = vmatprep.subr.mxu0 0.0
    %342 = vmatpush1.msra.mxu0 %v248
    %343 = vmatprep.subr.mxu0 0.0
    %344 = vmatpush1.msra.mxu0 %v249
    %345 = vmatprep.subr.mxu0 0.0
    %346 = vmatpush1.msra.mxu0 %v250
    %347 = vmatprep.subr.mxu0 0.0
    %348 = vmatpush1.msra.mxu0 %v251
    %349 = vmatprep.subr.mxu0 0.0
    %350 = vmatpush1.msra.mxu0 %v252
    %351 = vmatprep.subr.mxu0 0.0
    %352 = vmatpush1.msra.mxu0 %v253
    %353 = vmatprep.subr.mxu0 0.0
    %354 = vmatpush1.msra.mxu0 %v254
    %355 = vmatprep.subr.mxu0 0.0
    %356 = vmatpush1.msra.mxu0 %v255
    %357 = vmatprep.subr.mxu0 0.0
    %358 = vmatpush1.msra.mxu0 %v256
    %359 = vmatprep.subr.mxu0 0.0
    %360 = vmatpush1.msra.mxu0 %v257
    %361 = vmatprep.subr.mxu0 0.0
    %362 = vmatpush1.msra.mxu0 %v258
    %363 = vmatprep.subr.mxu0 0.0
    %364 = vmatpush1.msra.mxu0 %v259
    %365 = vmatprep.subr.mxu0 0.0
    %366 = vmatpush1.msra.mxu0 %v260
    %367 = vmatprep.subr.mxu0 0.0
    %368 = vmatpush1.msra.mxu0 %v261
    %369 = vmatprep.subr.mxu0 0.0
    %370 = vmatpush1.msra.mxu0 %v262
    %371 = vmatprep.subr.mxu0 0.0
    %372 = vmatpush1.msra.mxu0 %v263
    %373 = vmatprep.subr.mxu0 0.0
    %374 = vmatpush1.msra.mxu0 0.0
    %375 = vmatprep.subr.mxu0 0.0
    %376 = vmatpush1.msra.mxu0 0.0
    %377 = vmatprep.subr.mxu0 0.0
    %378 = vmatpush1.msra.mxu0 0.0
    %379 = vmatprep.subr.mxu0 0.0
    %380 = vmatpush1.msra.mxu0 0.0
    %381 = vmatprep.subr.mxu0 0.0
    %382 = vmatpush1.msra.mxu0 0.0
    %383 = vmatprep.subr.mxu0 0.0
    %384 = vmatpush1.msra.mxu0 0.0
    %385 = vmatprep.subr.mxu0 0.0
    %386 = vmatpush1.msra.mxu0 0.0
    %387 = vmatprep.subr.mxu0 0.0
    %388 = vmatpush1.msra.mxu0 0.0
    %389 = vmatprep.subr.mxu0 0.0
    %390 = vmatpush1.msra.mxu0 0.0
    %391 = vmatprep.subr.mxu0 0.0
    %392 = vmatpush1.msra.mxu0 0.0
    %393 = vmatprep.subr.mxu0 0.0
    %394 = vmatpush1.msra.mxu0 0.0
    %395 = vmatprep.subr.mxu0 0.0
    %396 = vmatpush1.msra.mxu0 0.0
    %397 = vmatprep.subr.mxu0 0.0
    %398 = vmatpush1.msra.mxu0 0.0
    %399 = vmatprep.subr.mxu0 0.0
    %400 = vmatpush1.msra.mxu0 0.0
    %401 = vmatprep.subr.mxu0 0.0
    %402 = vmatpush1.msra.mxu0 0.0
    %403 = vmatprep.subr.mxu0 0.0
    %404 = vmatpush1.msra.mxu0 0.0
    %405 = vmatprep.mubr.f32.mxu0 0.0
    %406 = vmatmul.mubr.f32.gmra.mrb[0].mxu0 %v215
    %v407 = vpop.f32.mrb[0].mxu0
    %v408 = vadd.f32 %v338, %v407
    %v409 = vpop.f32.mrb[0].mxu0
    %410 = vdwg.mxu0
    %v411 = vlaneseq
    %v412 = vand.u32 %v411, 127
    %v413 = vtanh.pop %v408
    %v414 = vmul.f32 %v413, 2.0
    %v415 = vmax.f32 %v408, 0.0
    %v416 = vand.u32 2147483647, %v408
    %v417 = vsub.f32 0.0, %v416
    %v418 = vmul.f32 %v417, 1.442695
    %v419 = vpow.pop %v418
    %v420 = vadd.f32 %v419, 1.0
    %v421 = vlog2.pop %v420
    %v422 = vmul.f32 %v421, 0.6931472
    %v423 = vmul.f32 -0.5, %v419
    %v424 = vadd.f32 %v423, 1.0
    %v425 = vmul.f32 %v424, %v419
    %v426 = vand.u32 2147483647, %v419
    %vm427 = vcmp.lt.f32.partialorder %v426, 0.0004427343
    %v428 = vsel %vm427, %v425, %v422
    %v429 = vadd.f32 %v415, %v428
    %v430 = vadd.f32 %v429, 0.001
    %vm431 = vcmp.lt.s32.totalorder %v412, 1
    %vm432 = vcmp.lt.s32.totalorder %v412, 2
    %v433 = vsel %vm432, %v430, %v408
    %v434 = vsel %vm431, %v414, %v433
    %435 = vst [vmem:[#allocation5] sm:$0xff] %v434
    // Predicated region
    $region26: #{tpu_custom_call.1} parent=1 // pred_check
      _
    $region27: #{tpu_custom_call.1} parent=1 // pred_check_branch
      %437 = sbr.rel (0) target = $region29
    $region28: #{tpu_custom_call.1} parent=1 // pred_region
      %s439 = ssub.s32 128, 128
      %440 = vsyncadd [#allocation4], %s439
      %s442 = sshll.u32 [#allocation5], 4
      %s443 = int_to_ptr.vmem [resolvable:$true] %s442
      %445 = dma.vmem_to_hbm [thread:$0]  %s443, 128, %s5, [#allocation4]
    $region29: #{tpu_custom_call.1} parent=1 // pred_fallthru
      _
    // Predicated region
    $region30: #{tpu_custom_call.1} parent=1 // pred_check
      _
    $region31: #{tpu_custom_call.1} parent=1 // pred_check_branch
      %447 = sbr.rel (0) target = $region33
    $region32: #{tpu_custom_call.1} parent=1 // pred_region
      %448 = dma.done [#allocation4], 128
    $region33: #{tpu_custom_call.1} parent=1 // pred_fallthru
      _
    %449 = vsyncpa [#allocation3], 1
    %450 = vsyncpa [#allocation4], 1

</llo_original>
